<compile_context>
chip_gen: v7x
topology: tpu7x:2x2x1
jax: 0.10.0
libtpu: 0.0.40
codegen_flags: <defaults>
</compile_context>

<pallas_src>
import jax
import jax.numpy as jnp
from jax.experimental import pallas as pl
from jax.experimental.pallas import tpu as pltpu


def _make_kl_kernel(num_branches, block_rows):
    """Builds the kernel for `num_branches` inputs and (block_rows,128) blocks."""

    def kernel(*args):
        x_refs = args[:num_branches]          # B inputs, each (block_rows, 128)
        out_ref = args[num_branches]          # (1, 8, 128) partial-sum output
        acc_ref = args[num_branches + 1]      # (block_rows, 128) f32 scratch

        k = pl.program_id(1)

        @pl.when(k == 0)
        def _():
            acc_ref[...] = jnp.zeros_like(acc_ref)

        # Load each branch block once; upcast to f32 in-register (keeps HBM
        # traffic in the caller's dtype, e.g. bf16, if that's what came in).
        x = [r[...].astype(jnp.float32) for r in x_refs]
        logx = [jnp.log(xi) for xi in x]      # one EUP log per branch

        total = None
        for i in range(num_branches):
            for j in range(i + 1, num_branches):
                d = logx[j] - logx[i]
                # kl(i->j) + kl(j->i) pointwise, with F.kl_div's t>0 guard.
                term = (jnp.where(x[j] > 0, x[j] * d, 0.0)
                        - jnp.where(x[i] > 0, x[i] * d, 0.0))
                total = term if total is None else total + term
        acc_ref[...] += total

        @pl.when(k == pl.num_programs(1) - 1)
        def _():
            # Fold (R,128) -> (8,128) with plain VPU adds (no cross-lane work);
            # the final scalar reduce over P*8*128 values happens in the wrapper.
            folded = jnp.sum(
                acc_ref[...].reshape(block_rows // 8, 8, 128), axis=0)
            out_ref[...] = folded.reshape(1, 8, 128)

    return kernel


def kl_loss_pallas(multi_mask, weight=0.0, size_average=True):
    """multi_mask: list of arrays with identical shape (e.g. (N, C, H, W))."""
    branch_number = len(multi_mask)
    if branch_number < 2:
        raise ValueError("KLLoss needs at least two branch masks")
    numel = multi_mask[0].size

    LANE = 128
    itemsize = jnp.dtype(multi_mask[0].dtype).itemsize
    sub = {4: 8, 2: 16, 1: 32}.get(itemsize, 8)   # sublane multiple per dtype

    # Partial-sum splits: lets v7x shard the "parallel" axis over its 2 TCs.
    P = 2
    rows0 = pl.cdiv(numel, LANE)

    # Block rows: large enough to amortize grid overhead (~512 KiB f32/branch
    # at R=1024), scaled down with branch count to stay well inside VMEM.
    r_target = max(sub, min(1024, ((3072 // branch_number) // sub) * sub))
    rows_per_split = ((pl.cdiv(rows0, P) + sub - 1) // sub) * sub
    R = min(r_target, rows_per_split)
    K = pl.cdiv(rows0, P * R)
    rows_padded = P * K * R
    Mp = rows_padded * LANE

    def prep(m):
        v = jnp.reshape(m, (-1,))
        if Mp != numel:
            # pad value 1.0 -> log 1 = 0 -> exactly zero KL contribution
            v = jnp.pad(v, (0, Mp - numel), constant_values=1.0)
        return jnp.reshape(v, (rows_padded, LANE))

    xs = [prep(m) for m in multi_mask]

    idx = lambda p, k: (p * K + k, 0)
    in_specs = [pl.BlockSpec((R, LANE), idx) for _ in range(branch_number)]
    out_specs = pl.BlockSpec((1, 8, LANE), lambda p, k: (p, 0, 0))

    partials = pl.pallas_call(
        _make_kl_kernel(branch_number, R),
        out_shape=jax.ShapeDtypeStruct((P, 8, LANE), jnp.float32),
        grid_spec=pltpu.PrefetchScalarGridSpec(
            num_scalar_prefetch=0,
            grid=(P, K),
            in_specs=in_specs,
            out_specs=out_specs,
            scratch_shapes=[pltpu.VMEM((R, LANE), jnp.float32)],
        ),
        compiler_params=pltpu.CompilerParams(
            dimension_semantics=("parallel", "arbitrary"),
            vmem_limit_bytes=32 * 1024 * 1024,
        ),
    )(*xs)

    pair_sum = jnp.sum(partials)
    if size_average:
        pair_sum = pair_sum / jnp.float32(numel)
    # NOTE: the module's default weight=0 makes the loss identically zero
    # (faithful to the original PyTorch); scaling kept as a scalar multiply.
    return pair_sum * jnp.float32(weight)


if __name__ == "__main__":
    key = jax.random.PRNGKey(0)
    N, C, H, W = 2, 4, 16, 16
    branches = 3
    weight = 0.5

    keys = jax.random.split(key, branches)
    multi_mask = []
    for k in keys:
        logits = jax.random.normal(k, (N, C, H, W), dtype=jnp.float32)
        # mask-like strictly-positive probabilities over the channel dim
        multi_mask.append(jax.nn.softmax(logits, axis=1))

    loss = kl_loss_pallas(multi_mask, weight=weight, size_average=True)
    loss = jax.block_until_ready(loss)

    # pure-JAX reference (same semantics as F.kl_div(log(x), t, reduction='mean'))
    def ref_kl(inp, tgt):
        pw = jnp.where(tgt > 0, tgt * (jnp.log(tgt) - jnp.log(inp)), 0.0)
        return jnp.mean(pw)

    ref = 0.0
    for i in range(branches):
        for j in range(branches):
            if i == j:
                continue
            ref = ref + ref_kl(multi_mask[i], multi_mask[j])
    ref = ref * weight

    assert jnp.allclose(loss, ref, rtol=1e-5, atol=1e-6), (float(loss), float(ref))
    print("KERNEL_OK")
</pallas_src>

<mosaic_0001>
module attributes {stable_mosaic.version = 11 : i64} {
  func.func @kernel(%arg0: i32, %arg1: i32, %arg2: memref<8x128xf32, #tpu.memory_space<vmem>>, %arg3: memref<8x128xf32, #tpu.memory_space<vmem>>, %arg4: memref<8x128xf32, #tpu.memory_space<vmem>>, %arg5: memref<1x8x128xf32, #tpu.memory_space<vmem>>, %arg6: memref<8x128xf32, #tpu.memory_space<vmem>>) attributes {dimension_semantics = [#tpu.dimension_semantics<parallel>, #tpu.dimension_semantics<arbitrary>], iteration_bounds = array<i64: 2, 1>, scalar_prefetch = 0 : i64, scratch_operands = 1 : i64, tpu.core_type = #tpu.core_type<tc>, window_params = [{transform_indices = @transform_0, window_bounds = array<i64: 8, 128>}, {transform_indices = @transform_1, window_bounds = array<i64: 8, 128>}, {transform_indices = @transform_2, window_bounds = array<i64: 8, 128>}, {transform_indices = @transform_3, window_bounds = array<i64: 1, 8, 128>}]} {
    %c0_i32 = arith.constant 0 : i32
    %0 = arith.cmpi eq, %arg1, %c0_i32 : i32
    %1 = arith.extui %0 : i1 to i32
    %c0_i32_0 = arith.constant 0 : i32
    %2 = arith.cmpi ne, %1, %c0_i32_0 : i32
    scf.if %2 {
      %cst_23 = arith.constant 0.000000e+00 : f32
      %53 = vector.broadcast %cst_23 : f32 to vector<8x128xf32>
      %c0_24 = arith.constant 0 : index
      %c0_25 = arith.constant 0 : index
      %54 = vector.load %arg6[%c0_24, %c0_25] : memref<8x128xf32, #tpu.memory_space<vmem>>, vector<8x128xf32>
      tpu.vector_store %arg6[%c0_24, %c0_25], %53 {strides = array<i32>} : memref<8x128xf32, #tpu.memory_space<vmem>>, vector<8x128xf32>,
    } else {
    }
    %c0 = arith.constant 0 : index
    %c0_1 = arith.constant 0 : index
    %3 = vector.load %arg2[%c0, %c0_1] : memref<8x128xf32, #tpu.memory_space<vmem>>, vector<8x128xf32>
    %c0_2 = arith.constant 0 : index
    %c0_3 = arith.constant 0 : index
    %4 = vector.load %arg3[%c0_2, %c0_3] : memref<8x128xf32, #tpu.memory_space<vmem>>, vector<8x128xf32>
    %c0_4 = arith.constant 0 : index
    %c0_5 = arith.constant 0 : index
    %5 = vector.load %arg4[%c0_4, %c0_5] : memref<8x128xf32, #tpu.memory_space<vmem>>, vector<8x128xf32>
    %6 = math.log %3 : vector<8x128xf32>
    %7 = math.log %4 : vector<8x128xf32>
    %8 = math.log %5 : vector<8x128xf32>
    %9 = arith.subf %7, %6 : vector<8x128xf32>
    %cst = arith.constant 0.000000e+00 : f32
    %10 = vector.broadcast %cst : f32 to vector<8x128xf32>
    %11 = arith.cmpf ogt, %4, %10 : vector<8x128xf32>
    %12 = arith.mulf %4, %9 : vector<8x128xf32>
    %cst_6 = arith.constant 0.000000e+00 : f32
    %13 = vector.broadcast %cst_6 : f32 to vector<8x128xf32>
    %14 = arith.select %11, %12, %13 : vector<8x128xi1>, vector<8x128xf32>
    %cst_7 = arith.constant 0.000000e+00 : f32
    %15 = vector.broadcast %cst_7 : f32 to vector<8x128xf32>
    %16 = arith.cmpf ogt, %3, %15 : vector<8x128xf32>
    %17 = arith.mulf %3, %9 : vector<8x128xf32>
    %cst_8 = arith.constant 0.000000e+00 : f32
    %18 = vector.broadcast %cst_8 : f32 to vector<8x128xf32>
    %19 = arith.select %16, %17, %18 : vector<8x128xi1>, vector<8x128xf32>
    %20 = arith.subf %14, %19 : vector<8x128xf32>
    %21 = arith.subf %8, %6 : vector<8x128xf32>
    %cst_9 = arith.constant 0.000000e+00 : f32
    %22 = vector.broadcast %cst_9 : f32 to vector<8x128xf32>
    %23 = arith.cmpf ogt, %5, %22 : vector<8x128xf32>
    %24 = arith.mulf %5, %21 : vector<8x128xf32>
    %cst_10 = arith.constant 0.000000e+00 : f32
    %25 = vector.broadcast %cst_10 : f32 to vector<8x128xf32>
    %26 = arith.select %23, %24, %25 : vector<8x128xi1>, vector<8x128xf32>
    %cst_11 = arith.constant 0.000000e+00 : f32
    %27 = vector.broadcast %cst_11 : f32 to vector<8x128xf32>
    %28 = arith.cmpf ogt, %3, %27 : vector<8x128xf32>
    %29 = arith.mulf %3, %21 : vector<8x128xf32>
    %cst_12 = arith.constant 0.000000e+00 : f32
    %30 = vector.broadcast %cst_12 : f32 to vector<8x128xf32>
    %31 = arith.select %28, %29, %30 : vector<8x128xi1>, vector<8x128xf32>
    %32 = arith.subf %26, %31 : vector<8x128xf32>
    %33 = arith.addf %20, %32 : vector<8x128xf32>
    %34 = arith.subf %8, %7 : vector<8x128xf32>
    %cst_13 = arith.constant 0.000000e+00 : f32
    %35 = vector.broadcast %cst_13 : f32 to vector<8x128xf32>
    %36 = arith.cmpf ogt, %5, %35 : vector<8x128xf32>
    %37 = arith.mulf %5, %34 : vector<8x128xf32>
    %cst_14 = arith.constant 0.000000e+00 : f32
    %38 = vector.broadcast %cst_14 : f32 to vector<8x128xf32>
    %39 = arith.select %36, %37, %38 : vector<8x128xi1>, vector<8x128xf32>
    %cst_15 = arith.constant 0.000000e+00 : f32
    %40 = vector.broadcast %cst_15 : f32 to vector<8x128xf32>
    %41 = arith.cmpf ogt, %4, %40 : vector<8x128xf32>
    %42 = arith.mulf %4, %34 : vector<8x128xf32>
    %cst_16 = arith.constant 0.000000e+00 : f32
    %43 = vector.broadcast %cst_16 : f32 to vector<8x128xf32>
    %44 = arith.select %41, %42, %43 : vector<8x128xi1>, vector<8x128xf32>
    %45 = arith.subf %39, %44 : vector<8x128xf32>
    %46 = arith.addf %33, %45 : vector<8x128xf32>
    %c0_17 = arith.constant 0 : index
    %c0_18 = arith.constant 0 : index
    %47 = vector.load %arg6[%c0_17, %c0_18] : memref<8x128xf32, #tpu.memory_space<vmem>>, vector<8x128xf32>
    %48 = arith.addf %47, %46 : vector<8x128xf32>
    %c0_19 = arith.constant 0 : index
    %c0_20 = arith.constant 0 : index
    %49 = vector.load %arg6[%c0_19, %c0_20] : memref<8x128xf32, #tpu.memory_space<vmem>>, vector<8x128xf32>
    tpu.vector_store %arg6[%c0_19, %c0_20], %48 {strides = array<i32>} : memref<8x128xf32, #tpu.memory_space<vmem>>, vector<8x128xf32>,
    %c0_i32_21 = arith.constant 0 : i32
    %50 = arith.cmpi eq, %arg1, %c0_i32_21 : i32
    %51 = arith.extui %50 : i1 to i32
    %c0_i32_22 = arith.constant 0 : i32
    %52 = arith.cmpi ne, %51, %c0_i32_22 : i32
    scf.if %52 {
      %c0_23 = arith.constant 0 : index
      %c0_24 = arith.constant 0 : index
      %53 = vector.load %arg6[%c0_23, %c0_24] : memref<8x128xf32, #tpu.memory_space<vmem>>, vector<8x128xf32>
      %54 = vector.shape_cast %53 : vector<8x128xf32> to vector<1x8x128xf32>
      %cst_25 = arith.constant dense<0.000000e+00> : vector<8x128xf32>
      %55 = vector.multi_reduction <add>, %54, %cst_25 [0] : vector<1x8x128xf32> to vector<8x128xf32>
      %56 = vector.shape_cast %55 : vector<8x128xf32> to vector<1x8x128xf32>
      %c0_26 = arith.constant 0 : index
      %c0_27 = arith.constant 0 : index
      %c0_28 = arith.constant 0 : index
      %57 = vector.load %arg5[%c0_26, %c0_27, %c0_28] : memref<1x8x128xf32, #tpu.memory_space<vmem>>, vector<1x8x128xf32>
      tpu.vector_store %arg5[%c0_26, %c0_27, %c0_28], %56 {strides = array<i32>} : memref<1x8x128xf32, #tpu.memory_space<vmem>>, vector<1x8x128xf32>,
    } else {
    }
    return
  }
  func.func @transform_0(%arg0: i32, %arg1: i32) -> (i32, i32) {
    %c1_i32 = arith.constant 1 : i32
    %0 = arith.muli %arg0, %c1_i32 : i32
    %1 = arith.addi %0, %arg1 : i32
    %c0_i32 = arith.constant 0 : i32
    %c0_i32_0 = arith.constant 0 : i32
    return %1, %c0_i32 : i32, i32
  }
  func.func @transform_1(%arg0: i32, %arg1: i32) -> (i32, i32) {
    %c1_i32 = arith.constant 1 : i32
    %0 = arith.muli %arg0, %c1_i32 : i32
    %1 = arith.addi %0, %arg1 : i32
    %c0_i32 = arith.constant 0 : i32
    %c0_i32_0 = arith.constant 0 : i32
    return %1, %c0_i32 : i32, i32
  }
  func.func @transform_2(%arg0: i32, %arg1: i32) -> (i32, i32) {
    %c1_i32 = arith.constant 1 : i32
    %0 = arith.muli %arg0, %c1_i32 : i32
    %1 = arith.addi %0, %arg1 : i32
    %c0_i32 = arith.constant 0 : i32
    %c0_i32_0 = arith.constant 0 : i32
    return %1, %c0_i32 : i32, i32
  }
  func.func @transform_3(%arg0: i32, %arg1: i32) -> (i32, i32, i32) {
    %c0_i32 = arith.constant 0 : i32
    %c0_i32_0 = arith.constant 0 : i32
    %c0_i32_1 = arith.constant 0 : i32
    return %arg0, %c0_i32, %c0_i32_0 : i32, i32, i32
  }
}

</mosaic_0001>

<llo_original>
// kernel: tpu_custom_call.1
$region0: #{tpu_custom_call.1}
  #allocation0 [shape = 'u32[]', space=smem, size = 0x4, offset = 0x4, fixed_abs, tag = 'smem constant byte address 0x4 - core index']
  #allocation1 [shape = 'u32[144,128]{1,0:T(1,128)}', space=vmem, size = 0x12000, scoped, tag = 'internal scratch']
  #allocation2 [shape = 'f32[8,128]{1,0:T(8,128)}', space=vmem, size = 0x1000, scoped, tag = 'scratch operand']
  %s0 = inlined_call_operand.hbm [shape: f32[16,128], index: 0, kind: input, shape index: {}]
  %s1 = inlined_call_operand.hbm [shape: f32[16,128], index: 1, kind: input, shape index: {}]
  %s2 = inlined_call_operand.hbm [shape: f32[16,128], index: 2, kind: input, shape index: {}]
  %s3 = inlined_call_operand.hbm [shape: f32[2,8,128], index: 3, kind: output, shape index: {}]
  %s4 = sld [smem:[#allocation0]]
  $region65: #{tpu_custom_call.1} parent=0
    _
  %s6 = ssub.s32 1, %s4
  %s7 = scalar_select 0, %s6, %s4
  $region1: #{tpu_custom_call.1} parent=0
    #allocation3 [shape = 'u8[8192]{0}', space=vmem, size = 0x2000, scoped, tag = 'input window, operand 0']
    #allocation4 [shape = 's32[2]{0}', space=sflag, size = 0x8, scoped, tag = 'scoped memory for tpu_custom_call.1']
    #allocation5 [shape = 's32[2]{0}', space=sflag, size = 0x8, scoped, tag = 'scoped memory for tpu_custom_call.1']
    #allocation6 [shape = 'u8[8192]{0}', space=vmem, size = 0x2000, scoped, tag = 'input window, operand 1']
    #allocation7 [shape = 's32[2]{0}', space=sflag, size = 0x8, scoped, tag = 'scoped memory for tpu_custom_call.1']
    #allocation8 [shape = 'u8[8192]{0}', space=vmem, size = 0x2000, scoped, tag = 'input window, operand 2']
    #allocation9 [shape = 'u8[8192]{0}', space=vmem, size = 0x2000, scoped, tag = 'output window, operand 0']
    %8 = vsyncpa [#allocation4], 0
    %s9 = scalar_lea.sflag [#allocation4], 1
    %10 = vsyncpa %s9, 0
    %11 = vsyncpa [#allocation7], 0
    %s12 = scalar_lea.sflag [#allocation7], 1
    %13 = vsyncpa %s12, 0
    %14 = vsyncpa [#allocation5], 0
    %s15 = scalar_lea.sflag [#allocation5], 1
    %16 = vsyncpa %s15, 0
    loop: start=0, step=1, limit=4
    $region2: #{tpu_custom_call.1} parent=1 // loop_pre_header
      _
    $region3: #{tpu_custom_call.1} parent=1 // loop_header
      %s18 = sphi 0, %s22
      %p19 = scmp.ge.s32.totalorder %s18, 4
      %s25 = sphi 0, %s37
      %s26 = sphi 0, %s33
      %s27 = sphi 0, %s25
      %s28 = sphi 0, %s26
      %s29 = sphi 0, %s27
      %s30 = sphi 0, %s28
      %s42 = sphi 0, %s44
      %s45 = sphi 0, %s42
      %s46 = sphi 0, %s45
      %s62 = sphi 0, %s46
      %s70 = sphi 0, %s72
      %s73 = sphi 0, %s70
      %s74 = sphi 0, %s73
      %s90 = sphi 0, %s74
      %s98 = sphi 0, %s100
      %s101 = sphi 0, %s98
      %s102 = sphi 0, %s101
      %s118 = sphi 0, %s102
      %s124 = sphi 0, %s126
      %s127 = sphi 0, %s124
      %s128 = sphi 0, %s127
      %s144 = sphi 0, %s128
    $region4: #{tpu_custom_call.1} parent=1 // loop_header_branch
      %21 = sbr.rel (%p19) target = $region8
    $region5: #{tpu_custom_call.1} parent=1 // loop_body
      %s23 = ssub.s32 %s18, 1
      %s24 = ssub.s32 %s18, 2
      %s31 = sadd.s32 1, %s26
      %p32 = scmp.ge.s32.totalorder %s31, 1
      %s33 = scalar_select %p32, 0, %s31
      %s34 = sadd.s32 1, %s25
      %s35 = scalar_select %p32, %s34, %s25
      %p36 = scmp.ge.s32.totalorder %s35, 2
      %s37 = scalar_select %p36, 0, %s35
      %s38 = sadd.s32 %s25, %s26
      %s39 = sadd.s32 %s37, %s33
      %s40 = ssub.s32 %s38, %s39
      %p41 = scmp.eq.s32.totalorder %s40, 0
      %s43 = sadd.s32 %s42, 1
      %s44 = scalar_select %p41, %s42, %s43
      %p47 = pneg %p41
      %p48 = scmp.eq.s32.totalorder %s18, 1
      %p49 = por %p47, %p48
      %p50 = scmp.ne.s32.totalorder %s42, %s45
      %p51 = scmp.eq.s32.totalorder %s18, 0
      %p52 = por %p50, %p51
      %p53 = scmp.ne.s32.totalorder %s42, %s45
      %p54 = scmp.eq.s32.totalorder %s23, 1
      %p55 = por %p53, %p54
      %p56 = scmp.ne.s32.totalorder %s45, %s46
      %p57 = scmp.eq.s32.totalorder %s23, 0
      %p58 = por %p56, %p57
      %p59 = scmp.ne.s32.totalorder %s45, %s46
      %p60 = scmp.eq.s32.totalorder %s24, 1
      %p61 = por %p59, %p60
      %p63 = scmp.ne.s32.totalorder %s46, %s62
      %p64 = scmp.eq.s32.totalorder %s24, 0
      %p65 = por %p63, %p64
      %s66 = sadd.s32 %s25, %s26
      %s67 = sadd.s32 %s37, %s33
      %s68 = ssub.s32 %s66, %s67
      %p69 = scmp.eq.s32.totalorder %s68, 0
      %s71 = sadd.s32 %s70, 1
      %s72 = scalar_select %p69, %s70, %s71
      %p75 = pneg %p69
      %p76 = scmp.eq.s32.totalorder %s18, 1
      %p77 = por %p75, %p76
      %p78 = scmp.ne.s32.totalorder %s70, %s73
      %p79 = scmp.eq.s32.totalorder %s18, 0
      %p80 = por %p78, %p79
      %p81 = scmp.ne.s32.totalorder %s70, %s73
      %p82 = scmp.eq.s32.totalorder %s23, 1
      %p83 = por %p81, %p82
      %p84 = scmp.ne.s32.totalorder %s73, %s74
      %p85 = scmp.eq.s32.totalorder %s23, 0
      %p86 = por %p84, %p85
      %p87 = scmp.ne.s32.totalorder %s73, %s74
      %p88 = scmp.eq.s32.totalorder %s24, 1
      %p89 = por %p87, %p88
      %p91 = scmp.ne.s32.totalorder %s74, %s90
      %p92 = scmp.eq.s32.totalorder %s24, 0
      %p93 = por %p91, %p92
      %s94 = sadd.s32 %s25, %s26
      %s95 = sadd.s32 %s37, %s33
      %s96 = ssub.s32 %s94, %s95
      %p97 = scmp.eq.s32.totalorder %s96, 0
      %s99 = sadd.s32 %s98, 1
      %s100 = scalar_select %p97, %s98, %s99
      %p103 = pneg %p97
      %p104 = scmp.eq.s32.totalorder %s18, 1
      %p105 = por %p103, %p104
      %p106 = scmp.ne.s32.totalorder %s98, %s101
      %p107 = scmp.eq.s32.totalorder %s18, 0
      %p108 = por %p106, %p107
      %p109 = scmp.ne.s32.totalorder %s98, %s101
      %p110 = scmp.eq.s32.totalorder %s23, 1
      %p111 = por %p109, %p110
      %p112 = scmp.ne.s32.totalorder %s101, %s102
      %p113 = scmp.eq.s32.totalorder %s23, 0
      %p114 = por %p112, %p113
      %p115 = scmp.ne.s32.totalorder %s101, %s102
      %p116 = scmp.eq.s32.totalorder %s24, 1
      %p117 = por %p115, %p116
      %p119 = scmp.ne.s32.totalorder %s102, %s118
      %p120 = scmp.eq.s32.totalorder %s24, 0
      %p121 = por %p119, %p120
      %s122 = ssub.s32 %s25, %s37
      %p123 = scmp.eq.s32.totalorder %s122, 0
      %s125 = sadd.s32 %s124, 1
      %s126 = scalar_select %p123, %s124, %s125
      %p129 = pneg %p123
      %p130 = scmp.eq.s32.totalorder %s18, 1
      %p131 = por %p129, %p130
      %p132 = scmp.ne.s32.totalorder %s124, %s127
      %p133 = scmp.eq.s32.totalorder %s18, 0
      %p134 = por %p132, %p133
      %p135 = scmp.ne.s32.totalorder %s124, %s127
      %p136 = scmp.eq.s32.totalorder %s23, 1
      %p137 = por %p135, %p136
      %p138 = scmp.ne.s32.totalorder %s127, %s128
      %p139 = scmp.eq.s32.totalorder %s23, 0
      %p140 = por %p138, %p139
      %p141 = scmp.ne.s32.totalorder %s127, %s128
      %p142 = scmp.eq.s32.totalorder %s24, 1
      %p143 = por %p141, %p142
      %p145 = scmp.ne.s32.totalorder %s128, %s144
      %p146 = scmp.eq.s32.totalorder %s24, 0
      %p147 = por %p145, %p146
      %p148 = scmp.le.s32.totalorder 1, %s18
      %p149 = scmp.lt.s32.totalorder %s18, 3
      %p150 = pnand %p148, %p149
      %p151 = pneg %p150
      // Predicated region
      $region9: #{tpu_custom_call.1} parent=5 // pred_check
        _
      $region10: #{tpu_custom_call.1} parent=5 // pred_check_branch
        %153 = sbr.rel (%p150) target = $region12
      $region11: #{tpu_custom_call.1} parent=5 // pred_region
        %s154 = ssub.s32 %s18, 1
      $region12: #{tpu_custom_call.1} parent=5 // pred_fallthru
        _
      %p155 = scmp.lt.s32.totalorder %s18, 2
      // Predicated region
      $region13: #{tpu_custom_call.1} parent=5 // pred_check
        %p156 = pneg %p155
      $region14: #{tpu_custom_call.1} parent=5 // pred_check_branch
        %158 = sbr.rel (%p156) target = $region16
      $region15: #{tpu_custom_call.1} parent=5 // pred_region
        // Predicated region
        $region17: #{tpu_custom_call.1} parent=15 // pred_check
          %p159 = pneg %p52
        $region18: #{tpu_custom_call.1} parent=15 // pred_check_branch
          %161 = sbr.rel (%p159) target = $region20
        $region19: #{tpu_custom_call.1} parent=15 // pred_region
          %s162 = sand.u32 %s42, 1
          %s163 = scalar_lea.sflag [#allocation4], %s162
          %s164 = sand.u32 %s42, 1
          %s165 = smul.addr %s164, 8
          %s166 = scalar_lea.vmem [#allocation3], %s165
          %s167 = sadd.s32 %s25, %s26
          %s169 = ssub.s32 128, 128
          %170 = vsyncadd %s163, %s169
          %s171 = smul.addr %s167, 128
          %s172 = scalar_lea.hbm %s0, %s171
          %s174 = sshll.u32 %s166, 4
          %s175 = int_to_ptr.vmem [resolvable:$true] %s174
          %177 = dma.hbm_to_vmem [thread:$0]  %s172, 128, %s175, %s163
        $region20: #{tpu_custom_call.1} parent=15 // pred_fallthru
          _
        // Predicated region
        $region21: #{tpu_custom_call.1} parent=15 // pred_check
          %p178 = pneg %p80
        $region22: #{tpu_custom_call.1} parent=15 // pred_check_branch
          %180 = sbr.rel (%p178) target = $region24
        $region23: #{tpu_custom_call.1} parent=15 // pred_region
          %s181 = sand.u32 %s18, 1
          %s182 = scalar_lea.sflag [#allocation7], %s181
          %s183 = sand.u32 %s70, 1
          %s184 = smul.addr %s183, 8
          %s185 = scalar_lea.vmem [#allocation6], %s184
          %s186 = sadd.s32 %s25, %s26
          %s188 = ssub.s32 128, 128
          %189 = vsyncadd %s182, %s188
          %s190 = smul.addr %s186, 128
          %s191 = scalar_lea.hbm %s1, %s190
          %s193 = sshll.u32 %s185, 4
          %s194 = int_to_ptr.vmem [resolvable:$true] %s193
          %196 = dma.hbm_to_vmem [thread:$0]  %s191, 128, %s194, %s182
        $region24: #{tpu_custom_call.1} parent=15 // pred_fallthru
          _
        // Predicated region
        $region25: #{tpu_custom_call.1} parent=15 // pred_check
          %p197 = pneg %p108
        $region26: #{tpu_custom_call.1} parent=15 // pred_check_branch
          %199 = sbr.rel (%p197) target = $region28
        $region27: #{tpu_custom_call.1} parent=15 // pred_region
          %s200 = sand.u32 %s18, 1
          %s201 = scalar_lea.sflag [#allocation7], %s200
          %s202 = sand.u32 %s98, 1
          %s203 = smul.addr %s202, 8
          %s204 = scalar_lea.vmem [#allocation8], %s203
          %s205 = sadd.s32 %s25, %s26
          %s207 = ssub.s32 128, 128
          %208 = vsyncadd %s201, %s207
          %s209 = smul.addr %s205, 128
          %s210 = scalar_lea.hbm %s2, %s209
          %s212 = sshll.u32 %s204, 4
          %s213 = int_to_ptr.vmem [resolvable:$true] %s212
          %215 = dma.hbm_to_vmem [thread:$0]  %s210, 128, %s213, %s201
        $region28: #{tpu_custom_call.1} parent=15 // pred_fallthru
          _
      $region16: #{tpu_custom_call.1} parent=5 // pred_fallthru
        _
      %p216 = scmp.le.s32.totalorder 1, %s18
      %p217 = scmp.lt.s32.totalorder %s18, 3
      %p218 = pnand %p216, %p217
      %p219 = pneg %p218
      // Predicated region
      $region29: #{tpu_custom_call.1} parent=5 // pred_check
        _
      $region30: #{tpu_custom_call.1} parent=5 // pred_check_branch
        %221 = sbr.rel (%p218) target = $region32
      $region31: #{tpu_custom_call.1} parent=5 // pred_region
        %s222 = ssub.s32 %s18, 1
        %s223 = sand.u32 %s45, 1
        %s224 = scalar_lea.sflag [#allocation4], %s223
        %s225 = sand.u32 %s45, 1
        %s226 = smul.addr %s225, 8
        %s227 = scalar_lea.vmem [#allocation3], %s226
        // Predicated region
        $region33: #{tpu_custom_call.1} parent=31 // pred_check
          %p228 = pneg %p58
        $region34: #{tpu_custom_call.1} parent=31 // pred_check_branch
          %230 = sbr.rel (%p228) target = $region36
        $region35: #{tpu_custom_call.1} parent=31 // pred_region
          %231 = dma.done %s224, 128
        $region36: #{tpu_custom_call.1} parent=31 // pred_fallthru
          _
        %s232 = sand.u32 %s23, 1
        %s233 = scalar_lea.sflag [#allocation7], %s232
        %s234 = sand.u32 %s73, 1
        %s235 = smul.addr %s234, 8
        %s236 = scalar_lea.vmem [#allocation6], %s235
        // Predicated region
        $region37: #{tpu_custom_call.1} parent=31 // pred_check
          %p237 = pneg %p86
        $region38: #{tpu_custom_call.1} parent=31 // pred_check_branch
          %239 = sbr.rel (%p237) target = $region40
        $region39: #{tpu_custom_call.1} parent=31 // pred_region
          %240 = dma.done %s233, 128
        $region40: #{tpu_custom_call.1} parent=31 // pred_fallthru
          _
        %s241 = sand.u32 %s23, 1
        %s242 = scalar_lea.sflag [#allocation7], %s241
        %s243 = sand.u32 %s101, 1
        %s244 = smul.addr %s243, 8
        %s245 = scalar_lea.vmem [#allocation8], %s244
        // Predicated region
        $region41: #{tpu_custom_call.1} parent=31 // pred_check
          %p246 = pneg %p114
        $region42: #{tpu_custom_call.1} parent=31 // pred_check_branch
          %248 = sbr.rel (%p246) target = $region44
        $region43: #{tpu_custom_call.1} parent=31 // pred_region
          %249 = dma.done %s242, 128
        $region44: #{tpu_custom_call.1} parent=31 // pred_fallthru
          _
        %s250 = sand.u32 %s45, 1
        %s251 = scalar_lea.sflag [#allocation4], %s250
        %s252 = sand.u32 %s45, 1
        %s253 = smul.addr %s252, 8
        %s254 = scalar_lea.vmem [#allocation3], %s253
        %p255 = pneg %p58
        %p256 = pneg %p55
        %s257 = sand.u32 %s23, 1
        %s258 = scalar_lea.sflag [#allocation7], %s257
        %s259 = sand.u32 %s73, 1
        %s260 = smul.addr %s259, 8
        %s261 = scalar_lea.vmem [#allocation6], %s260
        %p262 = pneg %p86
        %p263 = pneg %p83
        %s264 = sand.u32 %s23, 1
        %s265 = scalar_lea.sflag [#allocation7], %s264
        %s266 = sand.u32 %s101, 1
        %s267 = smul.addr %s266, 8
        %s268 = scalar_lea.vmem [#allocation8], %s267
        %p269 = pneg %p114
        %p270 = pneg %p111
        %p271 = pneg %p140
        %p272 = pneg %p137
        %s273 = sand.u32 %s127, 1
        %s274 = scalar_lea.sflag [#allocation5], %s273
        %s275 = sand.u32 %s127, 1
        %s276 = smul.addr %s275, 8
        %s277 = scalar_lea.vmem [#allocation9], %s276
        %s278 = sadd.s32 %s27, %s28
        %s279 = sadd.s32 %s27, %s28
        %s280 = sadd.s32 %s27, %s28
        %p281 = scmp.eq.s32.totalorder %s28, 0
        // Predicated region
        $region45: #{tpu_custom_call.1} parent=31 // pred_check
          %p282 = pneg %p281
        $region46: #{tpu_custom_call.1} parent=31 // pred_check_branch
          %284 = sbr.rel (%p282) target = $region48
        $region47: #{tpu_custom_call.1} parent=31 // pred_region
          %285 = vst [vmem:[#allocation2] sm:$0xff] 0.0
        $region48: #{tpu_custom_call.1} parent=31 // pred_fallthru
          _
        %v286 = vld [vmem:[%s227] sm:$0xff]
        %v287 = vld [vmem:[%s236] sm:$0xff]
        %v288 = vld [vmem:[%s245] sm:$0xff]
        %v289 = vlog2.pop %v286
        %v290 = vmul.f32 %v289, 0.6931472
        %v291 = vlog2.pop %v287
        %v292 = vmul.f32 %v291, 0.6931472
        %v293 = vlog2.pop %v288
        %v294 = vmul.f32 %v293, 0.6931472
        %v295 = vsub.f32 %v292, %v290
        %vm296 = vcmp.gt.f32.partialorder %v287, 0.0
        %v297 = vmul.f32 %v287, %v295
        %v298 = vsel %vm296, %v297, 0.0
        %vm299 = vcmp.gt.f32.partialorder %v286, 0.0
        %v300 = vmul.f32 %v286, %v295
        %v301 = vsel %vm299, %v300, 0.0
        %v302 = vsub.f32 %v298, %v301
        %v303 = vsub.f32 %v294, %v290
        %vm304 = vcmp.gt.f32.partialorder %v288, 0.0
        %v305 = vmul.f32 %v288, %v303
        %v306 = vsel %vm304, %v305, 0.0
        %v307 = vmul.f32 %v286, %v303
        %v308 = vsel %vm299, %v307, 0.0
        %v309 = vsub.f32 %v306, %v308
        %v310 = vadd.f32 %v302, %v309
        %v311 = vsub.f32 %v294, %v292
        %v312 = vmul.f32 %v288, %v311
        %v313 = vsel %vm304, %v312, 0.0
        %v314 = vmul.f32 %v287, %v311
        %v315 = vsel %vm296, %v314, 0.0
        %v316 = vsub.f32 %v313, %v315
        %v317 = vadd.f32 %v310, %v316
        %v318 = vld [vmem:[#allocation2] sm:$0xff]
        %v319 = vadd.f32 %v318, %v317
        %320 = vst [vmem:[#allocation2] sm:$0xff] %v319
        // Predicated region
        $region49: #{tpu_custom_call.1} parent=31 // pred_check
          %p321 = pneg %p281
        $region50: #{tpu_custom_call.1} parent=31 // pred_check_branch
          %323 = sbr.rel (%p321) target = $region52
        $region51: #{tpu_custom_call.1} parent=31 // pred_region
          %v324 = vld [vmem:[#allocation2] sm:$0xff]
          %v325 = vadd.f32 %v324, 0.0
          %326 = vst [vmem:[%s277] sm:$0xff] %v325
        $region52: #{tpu_custom_call.1} parent=31 // pred_fallthru
          _
        %s327 = sand.u32 %s127, 1
        %s328 = scalar_lea.sflag [#allocation5], %s327
        %s329 = sand.u32 %s127, 1
        %s330 = smul.addr %s329, 8
        %s331 = scalar_lea.vmem [#allocation9], %s330
        // Predicated region
        $region53: #{tpu_custom_call.1} parent=31 // pred_check
          %p332 = pneg %p137
        $region54: #{tpu_custom_call.1} parent=31 // pred_check_branch
          %334 = sbr.rel (%p332) target = $region56
        $region55: #{tpu_custom_call.1} parent=31 // pred_region
          %s336 = ssub.s32 128, 128
          %337 = vsyncadd %s328, %s336
          %s338 = smul.addr %s27, 128
          %s339 = scalar_lea.hbm %s3, %s338
          %s341 = sshll.u32 %s331, 4
          %s342 = int_to_ptr.vmem [resolvable:$true] %s341
          %344 = dma.vmem_to_hbm [thread:$0]  %s342, 128, %s339, %s328
        $region56: #{tpu_custom_call.1} parent=31 // pred_fallthru
          _
      $region32: #{tpu_custom_call.1} parent=5 // pred_fallthru
        _
      %p345 = scmp.le.s32.totalorder 2, %s18
      // Predicated region
      $region57: #{tpu_custom_call.1} parent=5 // pred_check
        %p346 = pneg %p345
      $region58: #{tpu_custom_call.1} parent=5 // pred_check_branch
        %348 = sbr.rel (%p346) target = $region60
      $region59: #{tpu_custom_call.1} parent=5 // pred_region
        %s349 = ssub.s32 %s18, 2
        // Predicated region
        $region61: #{tpu_custom_call.1} parent=59 // pred_check
          %p350 = pneg %p143
        $region62: #{tpu_custom_call.1} parent=59 // pred_check_branch
          %352 = sbr.rel (%p350) target = $region64
        $region63: #{tpu_custom_call.1} parent=59 // pred_region
          %s353 = sand.u32 %s128, 1
          %s354 = scalar_lea.sflag [#allocation5], %s353
          %s355 = sand.u32 %s128, 1
          %s356 = smul.addr %s355, 8
          %s357 = scalar_lea.vmem [#allocation9], %s356
          %358 = dma.done %s354, 128
        $region64: #{tpu_custom_call.1} parent=59 // pred_fallthru
          _
      $region60: #{tpu_custom_call.1} parent=5 // pred_fallthru
        _
    $region6: #{tpu_custom_call.1} parent=1 // loop_footer
      %s22 = sadd.s32 1, %s18
    $region7: #{tpu_custom_call.1} parent=1 // loop_footer_branch
      %17 = sbr.rel target = $region3
    $region8: #{tpu_custom_call.1} parent=1 // loop_exit
      _
    %359 = vsyncpa [#allocation4], 1
    %s360 = scalar_lea.sflag [#allocation4], 1
    %361 = vsyncpa %s360, 1
    %362 = vsyncpa [#allocation7], 1
    %s363 = scalar_lea.sflag [#allocation7], 1
    %364 = vsyncpa %s363, 1
    %365 = vsyncpa [#allocation5], 1
    %s366 = scalar_lea.sflag [#allocation5], 1
    %367 = vsyncpa %s366, 1

</llo_original>
